<compile_context>
chip_gen: v7x
topology: tpu7x:2x2x1
jax: 0.10.0
libtpu: 0.0.40
codegen_flags: <defaults>
</compile_context>

<pallas_src>
import jax
import jax.numpy as jnp
from jax.experimental import pallas as pl
from jax.experimental.pallas import tpu as pltpu

EPS = 1e-5                       # nn.BatchNorm1d default
_TINY_BYTES = 256 * 1024         # below this, skip pallas_call (launch overhead)
_BLOCK_BUDGET_CAP = 4 * 1024 * 1024


def _round_up(x, m):
    return (x + m - 1) // m * m


def _vmem_capacity_bytes():
    """Per-core VMEM capacity; conservative (v7x) fallback if query fails."""
    try:
        return int(pltpu.get_tpu_info().vmem_capacity_bytes)
    except Exception:
        return 64 * 1024 * 1024


def _sublane_multiple(dtype):
    itemsize = jnp.dtype(dtype).itemsize
    return max(8, 8 * (4 // max(1, itemsize)))   # f32->8, bf16->16, int8->32


def _pick_tiles(R, L, dtype):
    """Byte-budget, generation-aware tile picker for a (R, L) elementwise op."""
    itemsize = jnp.dtype(dtype).itemsize
    sub = _sublane_multiple(dtype)
    vmem_cap = _vmem_capacity_bytes()
    # v7x (64 MiB physical): 32 MiB limit; v5e/v6e (128 MiB): 64 MiB limit.
    vmem_limit = int(min(max(32 * 1024 * 1024, vmem_cap // 2), 64 * 1024 * 1024))
    # Per-block byte budget for the x tile (out tile same size, both
    # double-buffered by the pipeline -> ~4x this live in VMEM + tiny params).
    budget = int(min(_BLOCK_BUDGET_CAP, vmem_cap // 16))

    # Lane (last) dim: prefer long contiguous bursts.  Full extent is always
    # legal (even for non-128-multiple L) and avoids padding entirely.
    if L <= 128 or L * sub * itemsize <= budget:
        TL = L
    else:
        TL = (budget // (sub * itemsize)) // 128 * 128
        TL = max(128, min(TL, _round_up(L, 128)))

    # Sublane dim: grow rows to fill the byte budget; dtype-native multiple.
    TM = budget // max(1, TL * itemsize)
    TM = max(sub, (TM // sub) * sub)
    if TM >= R:
        TM = R                    # full extent along rows (legal for any R)

    # v7x has 2 TensorCores sharing HBM: make sure there are >= 2 blocks to
    # shard when the input is big enough to care.
    if pl.cdiv(R, TM) * pl.cdiv(L, TL) == 1 and R >= 2 * sub:
        TM = _round_up(pl.cdiv(R, 2), sub)

    return TM, TL, vmem_limit


def bn_affine_kernel(x_ref, scale_ref, shift_ref, o_ref):
    # x_ref: (TM, TL).  scale/shift broadcast against it:
    #   3D path: (TM, 1)  per-row params (row = flattened (n, c)) -> lane bcast
    #   2D path: (1, TC)  per-channel params (C on lane axis)     -> sublane bcast
    # Params are f32; compute in f32 and cast the result once.
    x = x_ref[...].astype(jnp.float32)
    o_ref[...] = (x * scale_ref[...] + shift_ref[...]).astype(o_ref.dtype)


def _bn_pallas_2d(x2, scale2, shift2, *, params_per_row):
    """x2: (R, L) lane-dense view; params are (R, 1) or (1, L) f32 arrays."""
    R, L = x2.shape
    TM, TL, vmem_limit = _pick_tiles(R, L, x2.dtype)
    grid = (pl.cdiv(R, TM), pl.cdiv(L, TL))

    if params_per_row:
        p_block, p_map = (TM, 1), (lambda i, j: (i, 0))
    else:
        p_block, p_map = (1, TL), (lambda i, j: (0, j))

    return pl.pallas_call(
        bn_affine_kernel,
        out_shape=jax.ShapeDtypeStruct((R, L), x2.dtype),
        grid_spec=pltpu.PrefetchScalarGridSpec(
            num_scalar_prefetch=0,
            grid=grid,
            in_specs=[
                pl.BlockSpec((TM, TL), lambda i, j: (i, j)),
                pl.BlockSpec(p_block, p_map),
                pl.BlockSpec(p_block, p_map),
            ],
            out_specs=pl.BlockSpec((TM, TL), lambda i, j: (i, j)),
        ),
        compiler_params=pltpu.CompilerParams(
            dimension_semantics=("parallel", "parallel"),
            vmem_limit_bytes=vmem_limit,
        ),
    )(x2, scale2, shift2)


def _fold_params(running_mean, running_var, gamma, beta):
    # Folded once in f32 in the wrapper (cost is negligible: C elements).
    mean = running_mean.astype(jnp.float32)
    var = running_var.astype(jnp.float32)
    g = gamma.astype(jnp.float32)
    b = beta.astype(jnp.float32)
    scale = g * jax.lax.rsqrt(var + EPS)
    shift = b - mean * scale
    return scale, shift


def batchnorm1d(x, running_mean, running_var, gamma=None, beta=None, *,
                force_pallas=False):
    """Eval-mode BatchNorm1d (PyTorch semantics). x: (N, C) or (N, C, L)."""
    if x.ndim not in (2, 3):
        raise ValueError("BatchNorm1d expects (N, C) or (N, C, L) input")
    C = x.shape[1]
    if gamma is None:   # PyTorch default affine init: weight = 1
        gamma = jnp.ones((C,), dtype=jnp.float32)
    if beta is None:    # PyTorch default affine init: bias = 0
        beta = jnp.zeros((C,), dtype=jnp.float32)
    scale, shift = _fold_params(running_mean, running_var, gamma, beta)

    nbytes = x.size * jnp.dtype(x.dtype).itemsize
    if (not force_pallas) and nbytes < _TINY_BYTES:
        # Tiny-input fast path: fused XLA elementwise is already at roofline;
        # pallas_call launch + per-step overhead would dominate.
        if x.ndim == 3:
            y = x.astype(jnp.float32) * scale[None, :, None] + shift[None, :, None]
        else:
            y = x.astype(jnp.float32) * scale[None, :] + shift[None, :]
        return y.astype(x.dtype)

    if x.ndim == 3:
        N, C_, L = x.shape
        R = N * C_
        x2 = x.reshape(R, L)   # free reshape: contiguous leading dims
        # Per-row scale/shift (row = (n, c)); tiny (N*C, 1) f32 arrays.
        scale_r = jnp.broadcast_to(scale[None, :], (N, C_)).reshape(R, 1)
        shift_r = jnp.broadcast_to(shift[None, :], (N, C_)).reshape(R, 1)
        out = _bn_pallas_2d(x2, scale_r, shift_r, params_per_row=True)
        return out.reshape(N, C_, L)

    # 2D (N, C): C on the lane axis, per-channel (1, C) params.
    return _bn_pallas_2d(x, scale.reshape(1, C), shift.reshape(1, C),
                         params_per_row=False)


if __name__ == "__main__":
    key = jax.random.PRNGKey(0)
    k1, k2, k3, km, kv = jax.random.split(key, 5)

    # Small EEG-like shapes: batch=4, num_features(channels)=8, seq length=128.
    N, C, L = 4, 8, 128
    Lr = 200  # not a multiple of 128 -> exercises the no-pad ragged/full-extent path
    x3 = jax.random.normal(k1, (N, C, L), dtype=jnp.float32)
    x3_ragged = jax.random.normal(k2, (N, C, Lr), dtype=jnp.float32)
    x2 = jax.random.normal(k3, (N, C), dtype=jnp.float32)
    x3_bf16 = x3.astype(jnp.bfloat16)

    # Deterministic "running" stats injected in the module's __init__.
    running_mean = jax.random.normal(km, (C,), dtype=jnp.float32)
    running_var = jax.random.uniform(kv, (C,), minval=0.5, maxval=1.5,
                                     dtype=jnp.float32)
    # PyTorch BatchNorm1d default affine init: weight=1, bias=0.
    gamma = jnp.ones((C,), dtype=jnp.float32)
    beta = jnp.zeros((C,), dtype=jnp.float32)

    # Pure-JAX reference (PyTorch eval-mode formula).
    inv = 1.0 / jnp.sqrt(running_var + EPS)

    def ref3(xx):
        return (gamma[None, :, None] * (xx - running_mean[None, :, None])
                * inv[None, :, None] + beta[None, :, None])

    def ref2(xx):
        return (gamma[None, :] * (xx - running_mean[None, :]) * inv[None, :]
                + beta[None, :])

    # Force the Pallas path so the kernel itself is exercised at these sizes.
    y3 = jax.block_until_ready(
        batchnorm1d(x3, running_mean, running_var, gamma, beta, force_pallas=True))
    y3r = jax.block_until_ready(
        batchnorm1d(x3_ragged, running_mean, running_var, gamma, beta,
                    force_pallas=True))
    y2 = jax.block_until_ready(
        batchnorm1d(x2, running_mean, running_var, gamma, beta, force_pallas=True))
    y3b = jax.block_until_ready(
        batchnorm1d(x3_bf16, running_mean, running_var, gamma, beta,
                    force_pallas=True))
    # Auto dispatch (tiny input -> XLA fast path).
    y3_auto = jax.block_until_ready(
        batchnorm1d(x3, running_mean, running_var, gamma, beta))

    assert y3.shape == (N, C, L)
    assert y3r.shape == (N, C, Lr)
    assert y2.shape == (N, C)
    assert y3b.shape == (N, C, L) and y3b.dtype == jnp.bfloat16
    assert jnp.max(jnp.abs(y3 - ref3(x3))) < 5e-5
    assert jnp.max(jnp.abs(y3r - ref3(x3_ragged))) < 5e-5
    assert jnp.max(jnp.abs(y2 - ref2(x2))) < 5e-5
    assert jnp.max(jnp.abs(y3_auto - ref3(x3))) < 5e-5
    assert jnp.max(jnp.abs(y3b.astype(jnp.float32)
                           - ref3(x3_bf16.astype(jnp.float32)))) < 3e-2

    print("KERNEL_OK")
</pallas_src>

<mosaic_0001>
module attributes {stable_mosaic.version = 11 : i64} {
  func.func @bn_affine_kernel(%arg0: i32, %arg1: i32, %arg2: memref<16x128xf32, #tpu.memory_space<vmem>>, %arg3: memref<16x1xf32, #tpu.memory_space<vmem>>, %arg4: memref<16x1xf32, #tpu.memory_space<vmem>>, %arg5: memref<16x128xf32, #tpu.memory_space<vmem>>) attributes {dimension_semantics = [#tpu.dimension_semantics<parallel>, #tpu.dimension_semantics<parallel>], iteration_bounds = array<i64: 2, 1>, scalar_prefetch = 0 : i64, scratch_operands = 0 : i64, tpu.core_type = #tpu.core_type<tc>, window_params = [{transform_indices = @transform_0, window_bounds = array<i64: 16, 128>}, {transform_indices = @transform_1, window_bounds = array<i64: 16, 1>}, {transform_indices = @transform_2, window_bounds = array<i64: 16, 1>}, {transform_indices = @transform_3, window_bounds = array<i64: 16, 128>}]} {
    %c0 = arith.constant 0 : index
    %c0_0 = arith.constant 0 : index
    %0 = vector.load %arg2[%c0, %c0_0] : memref<16x128xf32, #tpu.memory_space<vmem>>, vector<16x128xf32>
    %c0_1 = arith.constant 0 : index
    %c0_2 = arith.constant 0 : index
    %1 = vector.load %arg3[%c0_1, %c0_2] : memref<16x1xf32, #tpu.memory_space<vmem>>, vector<16x1xf32>
    %2 = vector.broadcast %1 : vector<16x1xf32> to vector<16x128xf32>
    %3 = arith.mulf %0, %2 : vector<16x128xf32>
    %c0_3 = arith.constant 0 : index
    %c0_4 = arith.constant 0 : index
    %4 = vector.load %arg4[%c0_3, %c0_4] : memref<16x1xf32, #tpu.memory_space<vmem>>, vector<16x1xf32>
    %5 = vector.broadcast %4 : vector<16x1xf32> to vector<16x128xf32>
    %6 = arith.addf %3, %5 : vector<16x128xf32>
    %c0_5 = arith.constant 0 : index
    %c0_6 = arith.constant 0 : index
    %7 = vector.load %arg5[%c0_5, %c0_6] : memref<16x128xf32, #tpu.memory_space<vmem>>, vector<16x128xf32>
    tpu.vector_store %arg5[%c0_5, %c0_6], %6 {strides = array<i32>} : memref<16x128xf32, #tpu.memory_space<vmem>>, vector<16x128xf32>,
    return
  }
  func.func @transform_0(%arg0: i32, %arg1: i32) -> (i32, i32) {
    %c0_i32 = arith.constant 0 : i32
    return %arg0, %arg1 : i32, i32
  }
  func.func @transform_1(%arg0: i32, %arg1: i32) -> (i32, i32) {
    %c0_i32 = arith.constant 0 : i32
    %c0_i32_0 = arith.constant 0 : i32
    return %arg0, %c0_i32 : i32, i32
  }
  func.func @transform_2(%arg0: i32, %arg1: i32) -> (i32, i32) {
    %c0_i32 = arith.constant 0 : i32
    %c0_i32_0 = arith.constant 0 : i32
    return %arg0, %c0_i32 : i32, i32
  }
  func.func @transform_3(%arg0: i32, %arg1: i32) -> (i32, i32) {
    %c0_i32 = arith.constant 0 : i32
    return %arg0, %arg1 : i32, i32
  }
}

</mosaic_0001>

<llo_original>
// kernel: tpu_custom_call.1
$region0: #{tpu_custom_call.1}
  #allocation0 [shape = 'u32[]', space=smem, size = 0x4, offset = 0x4, fixed_abs, tag = 'smem constant byte address 0x4 - core index']
  #allocation1 [shape = 'u32[144,128]{1,0:T(1,128)}', space=vmem, size = 0x12000, scoped, tag = 'internal scratch']
  %s0 = inlined_call_operand.vmem [shape: f32[32,128], index: 0, kind: input, shape index: {}]
  %s1 = inlined_call_operand.vmem [shape: f32[32,1], index: 1, kind: input, shape index: {}]
  %s2 = inlined_call_operand.vmem [shape: f32[32,1], index: 2, kind: input, shape index: {}]
  %s3 = inlined_call_operand.hbm [shape: f32[32,128], index: 3, kind: output, shape index: {}]
  %s4 = sld [smem:[#allocation0]]
  $region45: #{tpu_custom_call.1} parent=0
    _
  %s6 = ssub.s32 1, %s4
  %s7 = scalar_select 0, %s6, %s4
  $region1: #{tpu_custom_call.1} parent=0
    #allocation2 [shape = 'u8[16384]{0}', space=vmem, size = 0x4000, scoped, tag = 'output window, operand 0']
    #allocation3 [shape = 's32[2]{0}', space=sflag, size = 0x8, scoped, tag = 'scoped memory for tpu_custom_call.1']
    %8 = vsyncpa [#allocation3], 0
    %s9 = scalar_lea.sflag [#allocation3], 1
    %10 = vsyncpa %s9, 0
    loop: start=0, step=1, limit=4
    $region2: #{tpu_custom_call.1} parent=1 // loop_pre_header
      _
    $region3: #{tpu_custom_call.1} parent=1 // loop_header
      %s12 = sphi 0, %s16
      %p13 = scmp.ge.s32.totalorder %s12, 4
      %s19 = sphi 0, %s31
      %s20 = sphi 0, %s27
      %s21 = sphi 0, %s19
      %s22 = sphi 0, %s20
      %s23 = sphi 0, %s21
      %s24 = sphi 0, %s22
      %s36 = sphi 0, %s38
      %s39 = sphi 0, %s36
      %s40 = sphi 0, %s39
      %s56 = sphi 0, %s40
      %s62 = sphi 0, %s64
      %s65 = sphi 0, %s62
      %s66 = sphi 0, %s65
      %s82 = sphi 0, %s66
      %s88 = sphi 0, %s90
      %s91 = sphi 0, %s88
      %s92 = sphi 0, %s91
      %s108 = sphi 0, %s92
      %s116 = sphi 0, %s118
      %s119 = sphi 0, %s116
      %s120 = sphi 0, %s119
      %s136 = sphi 0, %s120
    $region4: #{tpu_custom_call.1} parent=1 // loop_header_branch
      %15 = sbr.rel (%p13) target = $region8
    $region5: #{tpu_custom_call.1} parent=1 // loop_body
      %s17 = ssub.s32 %s12, 1
      %s18 = ssub.s32 %s12, 2
      %s25 = sadd.s32 1, %s20
      %p26 = scmp.ge.s32.totalorder %s25, 1
      %s27 = scalar_select %p26, 0, %s25
      %s28 = sadd.s32 1, %s19
      %s29 = scalar_select %p26, %s28, %s19
      %p30 = scmp.ge.s32.totalorder %s29, 2
      %s31 = scalar_select %p30, 0, %s29
      %s32 = ssub.s32 %s19, %s31
      %s33 = ssub.s32 %s20, %s27
      %s34 = sor.u32 %s32, %s33
      %p35 = scmp.eq.s32.totalorder %s34, 0
      %s37 = sadd.s32 %s36, 1
      %s38 = scalar_select %p35, %s36, %s37
      %p41 = pneg %p35
      %p42 = scmp.eq.s32.totalorder %s12, 1
      %p43 = por %p41, %p42
      %p44 = scmp.ne.s32.totalorder %s36, %s39
      %p45 = scmp.eq.s32.totalorder %s12, 0
      %p46 = por %p44, %p45
      %p47 = scmp.ne.s32.totalorder %s36, %s39
      %p48 = scmp.eq.s32.totalorder %s17, 1
      %p49 = por %p47, %p48
      %p50 = scmp.ne.s32.totalorder %s39, %s40
      %p51 = scmp.eq.s32.totalorder %s17, 0
      %p52 = por %p50, %p51
      %p53 = scmp.ne.s32.totalorder %s39, %s40
      %p54 = scmp.eq.s32.totalorder %s18, 1
      %p55 = por %p53, %p54
      %p57 = scmp.ne.s32.totalorder %s40, %s56
      %p58 = scmp.eq.s32.totalorder %s18, 0
      %p59 = por %p57, %p58
      %s60 = ssub.s32 %s19, %s31
      %p61 = scmp.eq.s32.totalorder %s60, 0
      %s63 = sadd.s32 %s62, 1
      %s64 = scalar_select %p61, %s62, %s63
      %p67 = pneg %p61
      %p68 = scmp.eq.s32.totalorder %s12, 1
      %p69 = por %p67, %p68
      %p70 = scmp.ne.s32.totalorder %s62, %s65
      %p71 = scmp.eq.s32.totalorder %s12, 0
      %p72 = por %p70, %p71
      %p73 = scmp.ne.s32.totalorder %s62, %s65
      %p74 = scmp.eq.s32.totalorder %s17, 1
      %p75 = por %p73, %p74
      %p76 = scmp.ne.s32.totalorder %s65, %s66
      %p77 = scmp.eq.s32.totalorder %s17, 0
      %p78 = por %p76, %p77
      %p79 = scmp.ne.s32.totalorder %s65, %s66
      %p80 = scmp.eq.s32.totalorder %s18, 1
      %p81 = por %p79, %p80
      %p83 = scmp.ne.s32.totalorder %s66, %s82
      %p84 = scmp.eq.s32.totalorder %s18, 0
      %p85 = por %p83, %p84
      %s86 = ssub.s32 %s19, %s31
      %p87 = scmp.eq.s32.totalorder %s86, 0
      %s89 = sadd.s32 %s88, 1
      %s90 = scalar_select %p87, %s88, %s89
      %p93 = pneg %p87
      %p94 = scmp.eq.s32.totalorder %s12, 1
      %p95 = por %p93, %p94
      %p96 = scmp.ne.s32.totalorder %s88, %s91
      %p97 = scmp.eq.s32.totalorder %s12, 0
      %p98 = por %p96, %p97
      %p99 = scmp.ne.s32.totalorder %s88, %s91
      %p100 = scmp.eq.s32.totalorder %s17, 1
      %p101 = por %p99, %p100
      %p102 = scmp.ne.s32.totalorder %s91, %s92
      %p103 = scmp.eq.s32.totalorder %s17, 0
      %p104 = por %p102, %p103
      %p105 = scmp.ne.s32.totalorder %s91, %s92
      %p106 = scmp.eq.s32.totalorder %s18, 1
      %p107 = por %p105, %p106
      %p109 = scmp.ne.s32.totalorder %s92, %s108
      %p110 = scmp.eq.s32.totalorder %s18, 0
      %p111 = por %p109, %p110
      %s112 = ssub.s32 %s19, %s31
      %s113 = ssub.s32 %s20, %s27
      %s114 = sor.u32 %s112, %s113
      %p115 = scmp.eq.s32.totalorder %s114, 0
      %s117 = sadd.s32 %s116, 1
      %s118 = scalar_select %p115, %s116, %s117
      %p121 = pneg %p115
      %p122 = scmp.eq.s32.totalorder %s12, 1
      %p123 = por %p121, %p122
      %p124 = scmp.ne.s32.totalorder %s116, %s119
      %p125 = scmp.eq.s32.totalorder %s12, 0
      %p126 = por %p124, %p125
      %p127 = scmp.ne.s32.totalorder %s116, %s119
      %p128 = scmp.eq.s32.totalorder %s17, 1
      %p129 = por %p127, %p128
      %p130 = scmp.ne.s32.totalorder %s119, %s120
      %p131 = scmp.eq.s32.totalorder %s17, 0
      %p132 = por %p130, %p131
      %p133 = scmp.ne.s32.totalorder %s119, %s120
      %p134 = scmp.eq.s32.totalorder %s18, 1
      %p135 = por %p133, %p134
      %p137 = scmp.ne.s32.totalorder %s120, %s136
      %p138 = scmp.eq.s32.totalorder %s18, 0
      %p139 = por %p137, %p138
      %p140 = scmp.le.s32.totalorder 1, %s12
      %p141 = scmp.lt.s32.totalorder %s12, 3
      %p142 = pnand %p140, %p141
      %p143 = pneg %p142
      // Predicated region
      $region9: #{tpu_custom_call.1} parent=5 // pred_check
        _
      $region10: #{tpu_custom_call.1} parent=5 // pred_check_branch
        %145 = sbr.rel (%p142) target = $region12
      $region11: #{tpu_custom_call.1} parent=5 // pred_region
        %s146 = ssub.s32 %s12, 1
      $region12: #{tpu_custom_call.1} parent=5 // pred_fallthru
        _
      %p147 = scmp.lt.s32.totalorder %s12, 2
      // Predicated region
      $region13: #{tpu_custom_call.1} parent=5 // pred_check
        %p148 = pneg %p147
      $region14: #{tpu_custom_call.1} parent=5 // pred_check_branch
        %150 = sbr.rel (%p148) target = $region16
      $region15: #{tpu_custom_call.1} parent=5 // pred_region
        // Predicated region
        $region17: #{tpu_custom_call.1} parent=15 // pred_check
          %p151 = pneg %p46
        $region18: #{tpu_custom_call.1} parent=15 // pred_check_branch
          %153 = sbr.rel (%p151) target = $region20
        $region19: #{tpu_custom_call.1} parent=15 // pred_region
          %s154 = smul.u32 2, %s19
          %p155 = scmp.lt.s32.totalorder %s154, 3
          %s156 = scalar_select %p155, %s154, 3
          %p157 = scmp.lt.s32.totalorder %s20, 0
          %s158 = scalar_select %p157, %s20, 0
          %s159 = sadd.s32 %s158, %s156
          %s160 = smul.addr %s159, 8
          %s161 = scalar_lea.vmem %s0, %s160
          %s162 = smul.u32 2, %s19
        $region20: #{tpu_custom_call.1} parent=15 // pred_fallthru
          _
        // Predicated region
        $region21: #{tpu_custom_call.1} parent=15 // pred_check
          %p163 = pneg %p72
        $region22: #{tpu_custom_call.1} parent=15 // pred_check_branch
          %165 = sbr.rel (%p163) target = $region24
        $region23: #{tpu_custom_call.1} parent=15 // pred_region
          %s166 = smul.u32 2, %s19
          %p167 = scmp.lt.s32.totalorder %s166, 3
          %s168 = scalar_select %p167, %s166, 3
          %s169 = smul.addr %s168, 8
          %s170 = scalar_lea.vmem %s1, %s169
          %s171 = smul.u32 2, %s19
        $region24: #{tpu_custom_call.1} parent=15 // pred_fallthru
          _
        // Predicated region
        $region25: #{tpu_custom_call.1} parent=15 // pred_check
          %p172 = pneg %p98
        $region26: #{tpu_custom_call.1} parent=15 // pred_check_branch
          %174 = sbr.rel (%p172) target = $region28
        $region27: #{tpu_custom_call.1} parent=15 // pred_region
          %s175 = smul.u32 2, %s19
          %p176 = scmp.lt.s32.totalorder %s175, 3
          %s177 = scalar_select %p176, %s175, 3
          %s178 = smul.addr %s177, 8
          %s179 = scalar_lea.vmem %s2, %s178
          %s180 = smul.u32 2, %s19
        $region28: #{tpu_custom_call.1} parent=15 // pred_fallthru
          _
      $region16: #{tpu_custom_call.1} parent=5 // pred_fallthru
        _
      %p181 = scmp.le.s32.totalorder 1, %s12
      %p182 = scmp.lt.s32.totalorder %s12, 3
      %p183 = pnand %p181, %p182
      %p184 = pneg %p183
      // Predicated region
      $region29: #{tpu_custom_call.1} parent=5 // pred_check
        _
      $region30: #{tpu_custom_call.1} parent=5 // pred_check_branch
        %186 = sbr.rel (%p183) target = $region32
      $region31: #{tpu_custom_call.1} parent=5 // pred_region
        %s187 = ssub.s32 %s12, 1
        %s188 = smul.u32 2, %s21
        %p189 = scmp.lt.s32.totalorder %s188, 3
        %s190 = scalar_select %p189, %s188, 3
        %p191 = scmp.lt.s32.totalorder %s22, 0
        %s192 = scalar_select %p191, %s22, 0
        %s193 = sadd.s32 %s192, %s190
        %s194 = smul.addr %s193, 8
        %s195 = scalar_lea.vmem %s0, %s194
        %p196 = pneg %p52
        %p197 = pneg %p49
        %s198 = smul.u32 2, %s21
        %p199 = scmp.lt.s32.totalorder %s198, 3
        %s200 = scalar_select %p199, %s198, 3
        %s201 = smul.addr %s200, 8
        %s202 = scalar_lea.vmem %s1, %s201
        %p203 = pneg %p78
        %p204 = pneg %p75
        %s205 = smul.u32 2, %s21
        %p206 = scmp.lt.s32.totalorder %s205, 3
        %s207 = scalar_select %p206, %s205, 3
        %s208 = smul.addr %s207, 8
        %s209 = scalar_lea.vmem %s2, %s208
        %p210 = pneg %p104
        %p211 = pneg %p101
        %p212 = pneg %p132
        %p213 = pneg %p129
        %s214 = sand.u32 %s119, 1
        %s215 = scalar_lea.sflag [#allocation3], %s214
        %s216 = sand.u32 %s119, 1
        %s217 = smul.addr %s216, 16
        %s218 = scalar_lea.vmem [#allocation2], %s217
        %s219 = smul.u32 2, %s21
        %p220 = scmp.lt.s32.totalorder %s219, 3
        %s221 = scalar_select %p220, %s219, 3
        %p222 = scmp.lt.s32.totalorder %s22, 0
        %s223 = scalar_select %p222, %s22, 0
        %s224 = sadd.s32 %s223, %s221
        %s225 = smul.addr %s224, 8
        %s226 = scalar_lea.vmem %s0, %s225
        %s227 = smul.u32 2, %s21
        %s228 = smul.u32 2, %s21
        %p229 = scmp.lt.s32.totalorder %s228, 3
        %s230 = scalar_select %p229, %s228, 3
        %s231 = smul.addr %s230, 8
        %s232 = scalar_lea.vmem %s1, %s231
        %s233 = smul.u32 2, %s21
        %s234 = smul.u32 2, %s21
        %p235 = scmp.lt.s32.totalorder %s234, 3
        %s236 = scalar_select %p235, %s234, 3
        %s237 = smul.addr %s236, 8
        %s238 = scalar_lea.vmem %s2, %s237
        %s239 = smul.u32 2, %s21
        %s240 = smul.u32 2, %s21
        %v241 = vld [vmem:[%s226] sm:$0xff]
        %v242 = vld [vmem:[%s226 + $0x8] sm:$0xff]
        %v243 = vld [vmem:[%s232] sm:$0xff]
        %v244 = vld [vmem:[%s232 + $0x8] sm:$0xff]
        %246 = vset.pattern.permute.xlu0 0
        %247 = vperm.xlu0 %246, %v243
        %v248 = vpop.permute.xlu0 %247
        %251 = vset.pattern.permute.xlu0 0
        %252 = vperm.xlu0 %251, %v244
        %v253 = vpop.permute.xlu0 %252
        %v255 = vmul.f32 %v241, %v248
        %v256 = vmul.f32 %v242, %v253
        %v257 = vld [vmem:[%s238] sm:$0xff]
        %v258 = vld [vmem:[%s238 + $0x8] sm:$0xff]
        %260 = vset.pattern.permute.xlu0 0
        %261 = vperm.xlu0 %260, %v257
        %v262 = vpop.permute.xlu0 %261
        %265 = vset.pattern.permute.xlu0 0
        %266 = vperm.xlu0 %265, %v258
        %v267 = vpop.permute.xlu0 %266
        %v269 = vadd.f32 %v255, %v262
        %v270 = vadd.f32 %v256, %v267
        %271 = vst [vmem:[%s218] sm:$0xff] %v269
        %272 = vst [vmem:[%s218 + $0x8] sm:$0xff] %v270
        %s273 = sand.u32 %s119, 1
        %s274 = scalar_lea.sflag [#allocation3], %s273
        %s275 = sand.u32 %s119, 1
        %s276 = smul.addr %s275, 16
        %s277 = scalar_lea.vmem [#allocation2], %s276
        // Predicated region
        $region33: #{tpu_custom_call.1} parent=31 // pred_check
          %p278 = pneg %p129
        $region34: #{tpu_custom_call.1} parent=31 // pred_check_branch
          %280 = sbr.rel (%p278) target = $region36
        $region35: #{tpu_custom_call.1} parent=31 // pred_region
          %s281 = smul.u32 2, %s21
          %s283 = ssub.s32 256, 256
          %284 = vsyncadd %s274, %s283
          %s285 = sadd.s32 %s22, %s281
          %s286 = smul.addr %s285, 128
          %s287 = scalar_lea.hbm %s3, %s286
          %s288 = sshll.u32 %s277, 4
          %s289 = int_to_ptr.vmem [resolvable:$true] %s288
          %294 = dma.vmem_to_hbm [thread:$0]  %s289, 256, %s287, %s274, 128, 128, 8
        $region36: #{tpu_custom_call.1} parent=31 // pred_fallthru
          _
      $region32: #{tpu_custom_call.1} parent=5 // pred_fallthru
        _
      %p295 = scmp.le.s32.totalorder 2, %s12
      // Predicated region
      $region37: #{tpu_custom_call.1} parent=5 // pred_check
        %p296 = pneg %p295
      $region38: #{tpu_custom_call.1} parent=5 // pred_check_branch
        %298 = sbr.rel (%p296) target = $region40
      $region39: #{tpu_custom_call.1} parent=5 // pred_region
        %s299 = ssub.s32 %s12, 2
        // Predicated region
        $region41: #{tpu_custom_call.1} parent=39 // pred_check
          %p300 = pneg %p135
        $region42: #{tpu_custom_call.1} parent=39 // pred_check_branch
          %302 = sbr.rel (%p300) target = $region44
        $region43: #{tpu_custom_call.1} parent=39 // pred_region
          %s303 = sand.u32 %s120, 1
          %s304 = scalar_lea.sflag [#allocation3], %s303
          %s305 = sand.u32 %s120, 1
          %s306 = smul.addr %s305, 16
          %s307 = scalar_lea.vmem [#allocation2], %s306
          %308 = dma.done %s304, 256
        $region44: #{tpu_custom_call.1} parent=39 // pred_fallthru
          _
      $region40: #{tpu_custom_call.1} parent=5 // pred_fallthru
        _
    $region6: #{tpu_custom_call.1} parent=1 // loop_footer
      %s16 = sadd.s32 1, %s12
    $region7: #{tpu_custom_call.1} parent=1 // loop_footer_branch
      %11 = sbr.rel target = $region3
    $region8: #{tpu_custom_call.1} parent=1 // loop_exit
      _
    %309 = vsyncpa [#allocation3], 1
    %s310 = scalar_lea.sflag [#allocation3], 1
    %311 = vsyncpa %s310, 1

</llo_original>
